<compile_context>
chip_gen: v7x
topology: tpu7x:2x2x1
jax: 0.10.0
libtpu: 0.0.40
codegen_flags: <defaults>
</compile_context>

<pallas_src>
import jax
import jax.numpy as jnp
from jax.experimental import pallas as pl
from jax.experimental.pallas import tpu as pltpu

LAYERS = [1] + [20] * 3 + [4]   # [1, 20, 20, 20, 4]

# Packed-weight layout (single (48, 128) f32 array, weights stored (out, in)):
#   wp[ 0:20,  0:20] = W2 (20, 20)
#   wp[20:40,  0:20] = W3 (20, 20)
#   wp[40:44,  0:20] = W4 ( 4, 20)
#   wp[ 0:20, 20:21] = W1 (20,  1)
#   wp[ 0:20, 21:22] = b1 (20,  1)
#   wp[ 0:20, 22:23] = b2 (20,  1)
#   wp[ 0:20, 23:24] = b3 (20,  1)
#   wp[40:44, 20:21] = b4 ( 4,  1)
_WP_SHAPE = (48, 128)


def _mlp_kernel(x_ref, wp_ref, o_ref):
    x = x_ref[...]                    # (1, TB)  batch on lanes
    wp = wp_ref[...]                  # (48, 128) packed weights (resident)

    W2 = wp[0:20, 0:20]
    W3 = wp[20:40, 0:20]
    W4 = wp[40:44, 0:20]
    w1 = wp[0:20, 20:21]              # (20, 1)
    b1 = wp[0:20, 21:22]              # (20, 1)
    b2 = wp[0:20, 22:23]
    b3 = wp[0:20, 23:24]
    b4 = wp[40:44, 20:21]             # (4, 1)

    # Layer 1: d_in == 1 -> outer product via broadcast multiply (no MXU pass).
    h = jnp.tanh(w1 * x + b1)                                        # (20, TB)
    # Hidden layers 2/3: lane-dense matmuls, bias broadcast along lanes.
    h = jnp.tanh(jnp.dot(W2, h, preferred_element_type=jnp.float32) + b2)
    h = jnp.tanh(jnp.dot(W3, h, preferred_element_type=jnp.float32) + b3)
    # Output layer: Linear, no activation.
    o_ref[...] = (jnp.dot(W4, h, preferred_element_type=jnp.float32)
                  + b4).astype(o_ref.dtype)                          # (4, TB)


def pack_params(params):
    """Pack [(W(in,out), b(1,out))]*4 into one (48, 128) f32 array (out,in layout)."""
    (w1, b1), (w2, b2), (w3, b3), (w4, b4) = params
    wp = jnp.zeros(_WP_SHAPE, jnp.float32)
    wp = wp.at[0:20, 0:20].set(w2.T)
    wp = wp.at[20:40, 0:20].set(w3.T)
    wp = wp.at[40:44, 0:20].set(w4.T)
    wp = wp.at[0:20, 20:21].set(w1.T)
    wp = wp.at[0:20, 21:22].set(b1.T)
    wp = wp.at[0:20, 22:23].set(b2.T)
    wp = wp.at[0:20, 23:24].set(b3.T)
    wp = wp.at[40:44, 20:21].set(b4.T)
    return wp


def dnn_forward(x, params, *, tm=512):
    """x: (N, 1) float32.  params: list of (W_in_out, b_1_out) per layer."""
    N, d_in = x.shape
    assert d_in == LAYERS[0]
    d_out = LAYERS[-1]

    grid_n = pl.cdiv(N, tm)
    n_pad = grid_n * tm

    # Batch onto lanes, pad to a multiple of the batch tile.
    x_lanes = jnp.zeros((1, n_pad), jnp.float32).at[0, :N].set(x[:, 0])
    wp = pack_params(params)

    out_t = pl.pallas_call(
        _mlp_kernel,
        out_shape=jax.ShapeDtypeStruct((d_out, n_pad), jnp.float32),
        grid_spec=pltpu.PrefetchScalarGridSpec(
            num_scalar_prefetch=0,
            grid=(grid_n,),
            in_specs=[
                pl.BlockSpec((1, tm), lambda i: (0, i)),          # x tile
                pl.BlockSpec(_WP_SHAPE, lambda i: (0, 0)),        # packed weights
            ],
            out_specs=pl.BlockSpec((d_out, tm), lambda i: (0, i)),
        ),
        compiler_params=pltpu.CompilerParams(
            dimension_semantics=("parallel",)),
    )(x_lanes, wp)

    # Back to (N, 4) row-major like the PyTorch module.
    return out_t[:, :N].T


def init_params(key):
    """Deterministic init matching nn.Linear's default U(-1/sqrt(fan_in), +1/sqrt(fan_in))."""
    params = []
    for i in range(len(LAYERS) - 1):
        fan_in, fan_out = LAYERS[i], LAYERS[i + 1]
        key, kw, kb = jax.random.split(key, 3)
        bound = 1.0 / jnp.sqrt(jnp.float32(fan_in))
        w = jax.random.uniform(kw, (fan_in, fan_out), jnp.float32, -bound, bound)
        b = jax.random.uniform(kb, (1, fan_out), jnp.float32, -bound, bound)
        params.append((w, b))
    return params


def dnn_reference(x, params):
    h = x
    for i, (w, b) in enumerate(params):
        h = h @ w + b
        if i < len(params) - 1:
            h = jnp.tanh(h)
    return h


if __name__ == "__main__":
    key = jax.random.PRNGKey(0)
    key, kx = jax.random.split(key)

    N = 1000  # arbitrary (non-multiple-of-tile) batch; input feature dim is 1
    x = jax.random.normal(kx, (N, LAYERS[0]), jnp.float32)

    params = init_params(key)

    out = dnn_forward(x, params, tm=512)
    out = jax.block_until_ready(out)

    ref = dnn_reference(x, params)
    assert out.shape == (N, LAYERS[-1])
    assert jnp.allclose(out, ref, atol=1e-5, rtol=1e-5), "mismatch vs reference"

    print("KERNEL_OK")
</pallas_src>

<mosaic_0001>
module attributes {stable_mosaic.version = 11 : i64} {
  func.func @_mlp_kernel(%arg0: i32, %arg1: memref<1x512xf32, #tpu.memory_space<vmem>>, %arg2: memref<48x128xf32, #tpu.memory_space<vmem>>, %arg3: memref<4x512xf32, #tpu.memory_space<vmem>>) attributes {dimension_semantics = [#tpu.dimension_semantics<parallel>], iteration_bounds = array<i64: 2>, scalar_prefetch = 0 : i64, scratch_operands = 0 : i64, tpu.core_type = #tpu.core_type<tc>, window_params = [{transform_indices = @transform_0, window_bounds = array<i64: 1, 512>}, {pipeline_mode = #tpu.pipeline_mode<synchronous>, transform_indices = @transform_1, window_bounds = array<i64: 48, 128>}, {transform_indices = @transform_2, window_bounds = array<i64: 4, 512>}]} {
    %c0 = arith.constant 0 : index
    %c0_0 = arith.constant 0 : index
    %0 = vector.load %arg1[%c0, %c0_0] : memref<1x512xf32, #tpu.memory_space<vmem>>, vector<1x512xf32>
    %c0_1 = arith.constant 0 : index
    %c0_2 = arith.constant 0 : index
    %1 = vector.load %arg2[%c0_1, %c0_2] : memref<48x128xf32, #tpu.memory_space<vmem>>, vector<48x128xf32>
    %2 = vector.extract_strided_slice %1 {offsets = [0, 0], sizes = [20, 20], strides = [1, 1]} : vector<48x128xf32> to vector<20x20xf32>
    %3 = vector.extract_strided_slice %1 {offsets = [20, 0], sizes = [20, 20], strides = [1, 1]} : vector<48x128xf32> to vector<20x20xf32>
    %4 = vector.extract_strided_slice %1 {offsets = [40, 0], sizes = [4, 20], strides = [1, 1]} : vector<48x128xf32> to vector<4x20xf32>
    %5 = vector.extract_strided_slice %1 {offsets = [0, 20], sizes = [20, 1], strides = [1, 1]} : vector<48x128xf32> to vector<20x1xf32>
    %6 = vector.extract_strided_slice %1 {offsets = [0, 21], sizes = [20, 1], strides = [1, 1]} : vector<48x128xf32> to vector<20x1xf32>
    %7 = vector.extract_strided_slice %1 {offsets = [0, 22], sizes = [20, 1], strides = [1, 1]} : vector<48x128xf32> to vector<20x1xf32>
    %8 = vector.extract_strided_slice %1 {offsets = [0, 23], sizes = [20, 1], strides = [1, 1]} : vector<48x128xf32> to vector<20x1xf32>
    %9 = vector.extract_strided_slice %1 {offsets = [40, 20], sizes = [4, 1], strides = [1, 1]} : vector<48x128xf32> to vector<4x1xf32>
    %10 = vector.broadcast %5 : vector<20x1xf32> to vector<20x512xf32>
    %11 = vector.broadcast %0 : vector<1x512xf32> to vector<20x512xf32>
    %12 = arith.mulf %10, %11 : vector<20x512xf32>
    %13 = vector.broadcast %6 : vector<20x1xf32> to vector<20x512xf32>
    %14 = arith.addf %12, %13 : vector<20x512xf32>
    %15 = math.tanh %14 : vector<20x512xf32>
    %cst = arith.constant dense<0.000000e+00> : vector<20x512xf32>
    %16 = tpu.matmul %2, %15, %cst {dimension_numbers = #tpu.dot_dimension_numbers<[1], [0], [0], [1], [0, 0, 1, 1], [], []>} : vector<20x20xf32>, vector<20x512xf32>, vector<20x512xf32> -> vector<20x512xf32>
    %17 = vector.broadcast %7 : vector<20x1xf32> to vector<20x512xf32>
    %18 = arith.addf %16, %17 : vector<20x512xf32>
    %19 = math.tanh %18 : vector<20x512xf32>
    %cst_3 = arith.constant dense<0.000000e+00> : vector<20x512xf32>
    %20 = tpu.matmul %3, %19, %cst_3 {dimension_numbers = #tpu.dot_dimension_numbers<[1], [0], [0], [1], [0, 0, 1, 1], [], []>} : vector<20x20xf32>, vector<20x512xf32>, vector<20x512xf32> -> vector<20x512xf32>
    %21 = vector.broadcast %8 : vector<20x1xf32> to vector<20x512xf32>
    %22 = arith.addf %20, %21 : vector<20x512xf32>
    %23 = math.tanh %22 : vector<20x512xf32>
    %cst_4 = arith.constant dense<0.000000e+00> : vector<4x512xf32>
    %24 = tpu.matmul %4, %23, %cst_4 {dimension_numbers = #tpu.dot_dimension_numbers<[1], [0], [0], [1], [0, 0, 1, 1], [], []>} : vector<4x20xf32>, vector<20x512xf32>, vector<4x512xf32> -> vector<4x512xf32>
    %25 = vector.broadcast %9 : vector<4x1xf32> to vector<4x512xf32>
    %26 = arith.addf %24, %25 : vector<4x512xf32>
    %c0_5 = arith.constant 0 : index
    %c0_6 = arith.constant 0 : index
    %27 = vector.load %arg3[%c0_5, %c0_6] : memref<4x512xf32, #tpu.memory_space<vmem>>, vector<4x512xf32>
    tpu.vector_store %arg3[%c0_5, %c0_6], %26 {strides = array<i32>} : memref<4x512xf32, #tpu.memory_space<vmem>>, vector<4x512xf32>,
    return
  }
  func.func @transform_0(%arg0: i32) -> (i32, i32) {
    %c0_i32 = arith.constant 0 : i32
    %c0_i32_0 = arith.constant 0 : i32
    return %c0_i32, %arg0 : i32, i32
  }
  func.func @transform_1(%arg0: i32) -> (i32, i32) {
    %c0_i32 = arith.constant 0 : i32
    %c0_i32_0 = arith.constant 0 : i32
    %c0_i32_1 = arith.constant 0 : i32
    return %c0_i32, %c0_i32_0 : i32, i32
  }
  func.func @transform_2(%arg0: i32) -> (i32, i32) {
    %c0_i32 = arith.constant 0 : i32
    %c0_i32_0 = arith.constant 0 : i32
    return %c0_i32, %arg0 : i32, i32
  }
}

</mosaic_0001>

<llo_original>
// kernel: tpu_custom_call.1
$region0: #{tpu_custom_call.1}
  #allocation0 [shape = 'u32[]', space=smem, size = 0x4, offset = 0x4, fixed_abs, tag = 'smem constant byte address 0x4 - core index']
  #allocation1 [shape = 'u32[144,128]{1,0:T(1,128)}', space=vmem, size = 0x12000, scoped, tag = 'internal scratch']
  %s0 = inlined_call_operand.hbm [shape: f32[1,1024], index: 0, kind: input, shape index: {}]
  %s1 = inlined_call_operand.hbm [shape: f32[48,128], index: 1, kind: input, shape index: {}]
  %s2 = inlined_call_operand.hbm [shape: f32[4,1024], index: 2, kind: output, shape index: {}]
  %s3 = sld [smem:[#allocation0]]
  $region49: #{tpu_custom_call.1} parent=0
    _
  %s5 = ssub.s32 1, %s3
  %s6 = scalar_select 0, %s5, %s3
  $region1: #{tpu_custom_call.1} parent=0
    #allocation2 [shape = 'u8[4096]{0}', space=vmem, size = 0x1000, scoped, tag = 'input window, operand 0']
    #allocation3 [shape = 's32[2]{0}', space=sflag, size = 0x8, scoped, tag = 'scoped memory for tpu_custom_call.1']
    #allocation4 [shape = 's32[2]{0}', space=sflag, size = 0x8, scoped, tag = 'scoped memory for tpu_custom_call.1']
    #allocation5 [shape = 'u8[24576]{0}', space=vmem, size = 0x6000, scoped, tag = 'input window, operand 1, single buffered']
    #allocation6 [shape = 's32[1]{0}', space=sflag, size = 0x4, scoped, tag = 'scoped memory for tpu_custom_call.1']
    #allocation7 [shape = 'u8[16384]{0}', space=vmem, size = 0x4000, scoped, tag = 'output window, operand 0']
    %7 = vsyncpa [#allocation3], 0
    %s8 = scalar_lea.sflag [#allocation3], 1
    %9 = vsyncpa %s8, 0
    %10 = vsyncpa [#allocation6], 0
    %11 = vsyncpa [#allocation4], 0
    %s12 = scalar_lea.sflag [#allocation4], 1
    %13 = vsyncpa %s12, 0
    loop: start=0, step=1, limit=4
    $region2: #{tpu_custom_call.1} parent=1 // loop_pre_header
      _
    $region3: #{tpu_custom_call.1} parent=1 // loop_header
      %s15 = sphi 0, %s19
      %p16 = scmp.ge.s32.totalorder %s15, 4
      %s25 = sphi 0, %s27
      %s28 = sphi 0, %s25
      %s29 = sphi 0, %s28
      %s45 = sphi 0, %s29
      %s49 = sphi 0, %s49
      %s51 = sphi 0, %s49
      %s52 = sphi 0, %s51
      %s66 = sphi 0, %s52
      %s72 = sphi 0, %s74
      %s75 = sphi 0, %s72
      %s76 = sphi 0, %s75
      %s92 = sphi 0, %s76
    $region4: #{tpu_custom_call.1} parent=1 // loop_header_branch
      %18 = sbr.rel (%p16) target = $region8
    $region5: #{tpu_custom_call.1} parent=1 // loop_body
      %s20 = ssub.s32 %s15, 1
      %s21 = ssub.s32 %s15, 2
      %s22 = sadd.s32 %s15, 1
      %s23 = ssub.s32 %s15, %s22
      %p24 = scmp.eq.s32.totalorder %s23, 0
      %s26 = sadd.s32 %s25, 1
      %s27 = scalar_select %p24, %s25, %s26
      %p30 = pneg %p24
      %p31 = scmp.eq.s32.totalorder %s15, 1
      %p32 = por %p30, %p31
      %p33 = scmp.ne.s32.totalorder %s25, %s28
      %p34 = scmp.eq.s32.totalorder %s15, 0
      %p35 = por %p33, %p34
      %p36 = scmp.ne.s32.totalorder %s25, %s28
      %p37 = scmp.eq.s32.totalorder %s20, 1
      %p38 = por %p36, %p37
      %p39 = scmp.ne.s32.totalorder %s28, %s29
      %p40 = scmp.eq.s32.totalorder %s20, 0
      %p41 = por %p39, %p40
      %p42 = scmp.ne.s32.totalorder %s28, %s29
      %p43 = scmp.eq.s32.totalorder %s21, 1
      %p44 = por %p42, %p43
      %p46 = scmp.ne.s32.totalorder %s29, %s45
      %p47 = scmp.eq.s32.totalorder %s21, 0
      %p48 = por %p46, %p47
      %s50 = sadd.s32 %s49, 1
      %p53 = scmp.eq.s32.totalorder %s15, 1
      %p54 = scmp.ne.s32.totalorder %s49, %s51
      %p55 = scmp.eq.s32.totalorder %s15, 0
      %p56 = por %p54, %p55
      %p57 = scmp.ne.s32.totalorder %s49, %s51
      %p58 = scmp.eq.s32.totalorder %s20, 1
      %p59 = por %p57, %p58
      %p60 = scmp.ne.s32.totalorder %s51, %s52
      %p61 = scmp.eq.s32.totalorder %s20, 0
      %p62 = por %p60, %p61
      %p63 = scmp.ne.s32.totalorder %s51, %s52
      %p64 = scmp.eq.s32.totalorder %s21, 1
      %p65 = por %p63, %p64
      %p67 = scmp.ne.s32.totalorder %s52, %s66
      %p68 = scmp.eq.s32.totalorder %s21, 0
      %p69 = por %p67, %p68
      %s70 = ssub.s32 %s15, %s22
      %p71 = scmp.eq.s32.totalorder %s70, 0
      %s73 = sadd.s32 %s72, 1
      %s74 = scalar_select %p71, %s72, %s73
      %p77 = pneg %p71
      %p78 = scmp.eq.s32.totalorder %s15, 1
      %p79 = por %p77, %p78
      %p80 = scmp.ne.s32.totalorder %s72, %s75
      %p81 = scmp.eq.s32.totalorder %s15, 0
      %p82 = por %p80, %p81
      %p83 = scmp.ne.s32.totalorder %s72, %s75
      %p84 = scmp.eq.s32.totalorder %s20, 1
      %p85 = por %p83, %p84
      %p86 = scmp.ne.s32.totalorder %s75, %s76
      %p87 = scmp.eq.s32.totalorder %s20, 0
      %p88 = por %p86, %p87
      %p89 = scmp.ne.s32.totalorder %s75, %s76
      %p90 = scmp.eq.s32.totalorder %s21, 1
      %p91 = por %p89, %p90
      %p93 = scmp.ne.s32.totalorder %s76, %s92
      %p94 = scmp.eq.s32.totalorder %s21, 0
      %p95 = por %p93, %p94
      %p96 = scmp.le.s32.totalorder 1, %s15
      %p97 = scmp.lt.s32.totalorder %s15, 3
      %p98 = pnand %p96, %p97
      %p99 = pneg %p98
      // Predicated region
      $region9: #{tpu_custom_call.1} parent=5 // pred_check
        _
      $region10: #{tpu_custom_call.1} parent=5 // pred_check_branch
        %101 = sbr.rel (%p98) target = $region12
      $region11: #{tpu_custom_call.1} parent=5 // pred_region
        %s102 = ssub.s32 %s15, 1
        // Predicated region
        $region13: #{tpu_custom_call.1} parent=11 // pred_check
          %p103 = pneg %p62
        $region14: #{tpu_custom_call.1} parent=11 // pred_check_branch
          %105 = sbr.rel (%p103) target = $region16
        $region15: #{tpu_custom_call.1} parent=11 // pred_region
          %s107 = ssub.s32 768, 768
          %108 = vsyncadd [#allocation6], %s107
          %s109 = sshll.u32 [#allocation5], 4
          %s110 = int_to_ptr.vmem [resolvable:$true] %s109
          %115 = dma.hbm_to_vmem [thread:$0]  %s1, 768, %s110, [#allocation6], 128, 128, 8
        $region16: #{tpu_custom_call.1} parent=11 // pred_fallthru
          _
      $region12: #{tpu_custom_call.1} parent=5 // pred_fallthru
        _
      %p116 = scmp.lt.s32.totalorder %s15, 2
      // Predicated region
      $region17: #{tpu_custom_call.1} parent=5 // pred_check
        %p117 = pneg %p116
      $region18: #{tpu_custom_call.1} parent=5 // pred_check_branch
        %119 = sbr.rel (%p117) target = $region20
      $region19: #{tpu_custom_call.1} parent=5 // pred_region
        // Predicated region
        $region21: #{tpu_custom_call.1} parent=19 // pred_check
          %p120 = pneg %p35
        $region22: #{tpu_custom_call.1} parent=19 // pred_check_branch
          %122 = sbr.rel (%p120) target = $region24
        $region23: #{tpu_custom_call.1} parent=19 // pred_region
          %s123 = sand.u32 %s25, 1
          %s124 = scalar_lea.sflag [#allocation3], %s123
          %s125 = sand.u32 %s25, 1
          %s126 = smul.addr %s125, 4
          %s127 = scalar_lea.vmem [#allocation2], %s126
          %s128 = smul.u32 4, %s15
          %s130 = ssub.s32 64, 64
          %131 = vsyncadd %s124, %s130
          %s132 = smul.addr %s128, 16
          %s133 = scalar_lea.hbm %s0, %s132
          %s135 = sshll.u32 %s127, 4
          %s136 = int_to_ptr.vmem [resolvable:$true] %s135
          %138 = dma.hbm_to_vmem [thread:$0]  %s133, 64, %s136, %s124
        $region24: #{tpu_custom_call.1} parent=19 // pred_fallthru
          _
      $region20: #{tpu_custom_call.1} parent=5 // pred_fallthru
        _
      %p139 = scmp.le.s32.totalorder 1, %s15
      %p140 = scmp.lt.s32.totalorder %s15, 3
      %p141 = pnand %p139, %p140
      %p142 = pneg %p141
      // Predicated region
      $region25: #{tpu_custom_call.1} parent=5 // pred_check
        _
      $region26: #{tpu_custom_call.1} parent=5 // pred_check_branch
        %144 = sbr.rel (%p141) target = $region28
      $region27: #{tpu_custom_call.1} parent=5 // pred_region
        %s145 = ssub.s32 %s15, 1
        %s146 = sand.u32 %s28, 1
        %s147 = scalar_lea.sflag [#allocation3], %s146
        %s148 = sand.u32 %s28, 1
        %s149 = smul.addr %s148, 4
        %s150 = scalar_lea.vmem [#allocation2], %s149
        // Predicated region
        $region29: #{tpu_custom_call.1} parent=27 // pred_check
          %p151 = pneg %p41
        $region30: #{tpu_custom_call.1} parent=27 // pred_check_branch
          %153 = sbr.rel (%p151) target = $region32
        $region31: #{tpu_custom_call.1} parent=27 // pred_region
          %154 = dma.done %s147, 64
        $region32: #{tpu_custom_call.1} parent=27 // pred_fallthru
          _
        // Predicated region
        $region33: #{tpu_custom_call.1} parent=27 // pred_check
          %p155 = pneg %p62
        $region34: #{tpu_custom_call.1} parent=27 // pred_check_branch
          %157 = sbr.rel (%p155) target = $region36
        $region35: #{tpu_custom_call.1} parent=27 // pred_region
          %158 = dma.done [#allocation6], 768
        $region36: #{tpu_custom_call.1} parent=27 // pred_fallthru
          _
        %s159 = sand.u32 %s28, 1
        %s160 = scalar_lea.sflag [#allocation3], %s159
        %s161 = sand.u32 %s28, 1
        %s162 = smul.addr %s161, 4
        %s163 = scalar_lea.vmem [#allocation2], %s162
        %p164 = pneg %p41
        %p165 = pneg %p38
        %p166 = pneg %p62
        %p167 = pneg %p59
        %p168 = pneg %p88
        %p169 = pneg %p85
        %s170 = sand.u32 %s75, 1
        %s171 = scalar_lea.sflag [#allocation4], %s170
        %s172 = sand.u32 %s75, 1
        %s173 = smul.addr %s172, 16
        %s174 = scalar_lea.vmem [#allocation7], %s173
        %s175 = smul.u32 4, %s20
        %s176 = smul.u32 4, %s20
        %v177 = vld [vmem:[%s150] sm:$0xf]
        %v178 = vld [vmem:[#allocation5] sm:$0xff]
        %v179 = vld [vmem:[#allocation5 + $0x8] sm:$0xff]
        %v180 = vld [vmem:[#allocation5 + $0x10] sm:$0xff]
        %v181 = vld [vmem:[#allocation5 + $0x18] sm:$0xff]
        %v182 = vld [vmem:[#allocation5 + $0x20] sm:$0xff]
        %v183 = vld [vmem:[#allocation5 + $0x28] sm:$0xff]
        %185 = vset.pattern.permute.xlu0 20
        %186 = vperm.xlu0 %185, %v178
        %v187 = vpop.permute.xlu0 %186
        %190 = vset.pattern.permute.xlu0 20
        %191 = vperm.xlu0 %190, %v179
        %v192 = vpop.permute.xlu0 %191
        %195 = vset.pattern.permute.xlu0 20
        %196 = vperm.xlu0 %195, %v180
        %v197 = vpop.permute.xlu0 %196
        %v200 = vlaneseq
        %v201 = vshrl.u32 %v200, 7
        %v202 = vsub.s32 0, %v201
        %v203 = vrot.slane %v177, %v202
        %v204 = vlaneseq
        %v205 = vshrl.u32 %v204, 7
        %v206 = vsub.s32 1, %v205
        %v207 = vrot.slane %v177, %v206
        %v208 = vlaneseq
        %v209 = vshrl.u32 %v208, 7
        %v210 = vsub.s32 2, %v209
        %v211 = vrot.slane %v177, %v210
        %v212 = vlaneseq
        %v213 = vshrl.u32 %v212, 7
        %v214 = vsub.s32 3, %v213
        %v215 = vrot.slane %v177, %v214
        %v220 = vmul.f32 %v187, %v203
        %v221 = vmul.f32 %v187, %v207
        %v222 = vmul.f32 %v187, %v211
        %v223 = vmul.f32 %v187, %v215
        %v224 = vmul.f32 %v192, %v203
        %v225 = vmul.f32 %v192, %v207
        %v226 = vmul.f32 %v192, %v211
        %v227 = vmul.f32 %v192, %v215
        %v228 = vmul.f32 %v197, %v203
        %v229 = vmul.f32 %v197, %v207
        %v230 = vmul.f32 %v197, %v211
        %v231 = vmul.f32 %v197, %v215
        %232 = vset.pattern.permute.xlu0 21
        %233 = vperm.xlu0 %232, %v178
        %v234 = vpop.permute.xlu0 %233
        %236 = vset.pattern.permute.xlu0 21
        %237 = vperm.xlu0 %236, %v179
        %v238 = vpop.permute.xlu0 %237
        %240 = vset.pattern.permute.xlu0 21
        %241 = vperm.xlu0 %240, %v180
        %v242 = vpop.permute.xlu0 %241
        %v244 = vadd.f32 %v220, %v234
        %v245 = vadd.f32 %v221, %v234
        %v246 = vadd.f32 %v222, %v234
        %v247 = vadd.f32 %v223, %v234
        %v248 = vadd.f32 %v224, %v238
        %v249 = vadd.f32 %v225, %v238
        %v250 = vadd.f32 %v226, %v238
        %v251 = vadd.f32 %v227, %v238
        %v252 = vadd.f32 %v228, %v242
        %v253 = vadd.f32 %v229, %v242
        %v254 = vadd.f32 %v230, %v242
        %v255 = vadd.f32 %v231, %v242
        %v256 = vtanh.pop %v244
        %v257 = vtanh.pop %v245
        %v258 = vtanh.pop %v246
        %v259 = vtanh.pop %v247
        %v260 = vtanh.pop %v248
        %v261 = vtanh.pop %v249
        %v262 = vtanh.pop %v250
        %v263 = vtanh.pop %v251
        %v264 = vtanh.pop %v252
        %v265 = vtanh.pop %v253
        %v266 = vtanh.pop %v254
        %v267 = vtanh.pop %v255
        %268 = vset.pattern.permute.xlu0 22
        %269 = vperm.xlu0 %268, %v178
        %v270 = vpop.permute.xlu0 %269
        %272 = vset.pattern.permute.xlu0 22
        %273 = vperm.xlu0 %272, %v179
        %v274 = vpop.permute.xlu0 %273
        %276 = vset.pattern.permute.xlu0 22
        %277 = vperm.xlu0 %276, %v180
        %v278 = vpop.permute.xlu0 %277
        %vm280 = vcmask 162816
        %v281 = vsel %vm280, %v178, 0
        %v283 = vsel %vm280, %v179, 0
        %v285 = vsel %vm280, %v180, 0
        %vm287 = vcmask 1043456
        %v289 = vsel %vm287, %v264, 0
        %v292 = vsel %vm287, %v265, 0
        %v295 = vsel %vm287, %v266, 0
        %v298 = vsel %vm287, %v267, 0
        %300 = vmatprep.subr.mxu0 %v257
        %301 = vmatpush1.msra.mxu0 %v256
        %302 = vmatprep.subr.mxu0 %v261
        %303 = vmatpush1.msra.mxu0 %v260
        %304 = vmatprep.subr.mxu0 %v292
        %305 = vmatpush1.msra.mxu0 %v289
        %306 = vmatprep.subr.mxu0 0.0
        %307 = vmatpush1.msra.mxu0 0.0
        %308 = vmatprep.subr.mxu0 0.0
        %309 = vmatpush1.msra.mxu0 0.0
        %310 = vmatprep.subr.mxu0 0.0
        %311 = vmatpush1.msra.mxu0 0.0
        %312 = vmatprep.subr.mxu0 0.0
        %313 = vmatpush1.msra.mxu0 0.0
        %314 = vmatprep.subr.mxu0 0.0
        %315 = vmatpush1.msra.mxu0 0.0
        %316 = vmatprep.subr.mxu0 0.0
        %317 = vmatpush1.msra.mxu0 0.0
        %318 = vmatprep.subr.mxu0 0.0
        %319 = vmatpush1.msra.mxu0 0.0
        %320 = vmatprep.subr.mxu0 0.0
        %321 = vmatpush1.msra.mxu0 0.0
        %322 = vmatprep.subr.mxu0 0.0
        %323 = vmatpush1.msra.mxu0 0.0
        %324 = vmatprep.subr.mxu0 0.0
        %325 = vmatpush1.msra.mxu0 0.0
        %326 = vmatprep.subr.mxu0 0.0
        %327 = vmatpush1.msra.mxu0 0.0
        %328 = vmatprep.subr.mxu0 0.0
        %329 = vmatpush1.msra.mxu0 0.0
        %330 = vmatprep.subr.mxu0 0.0
        %331 = vmatpush1.msra.mxu0 0.0
        %332 = vmatprep.subr.mxu0 0.0
        %333 = vmatpush1.msra.mxu0 0.0
        %334 = vmatprep.subr.mxu0 0.0
        %335 = vmatpush1.msra.mxu0 0.0
        %336 = vmatprep.subr.mxu0 0.0
        %337 = vmatpush1.msra.mxu0 0.0
        %338 = vmatprep.subr.mxu0 0.0
        %339 = vmatpush1.msra.mxu0 0.0
        %340 = vmatprep.subr.mxu0 0.0
        %341 = vmatpush1.msra.mxu0 0.0
        %342 = vmatprep.subr.mxu0 0.0
        %343 = vmatpush1.msra.mxu0 0.0
        %344 = vmatprep.subr.mxu0 0.0
        %345 = vmatpush1.msra.mxu0 0.0
        %346 = vmatprep.subr.mxu0 0.0
        %347 = vmatpush1.msra.mxu0 0.0
        %348 = vmatprep.subr.mxu0 0.0
        %349 = vmatpush1.msra.mxu0 0.0
        %350 = vmatprep.subr.mxu0 0.0
        %351 = vmatpush1.msra.mxu0 0.0
        %352 = vmatprep.subr.mxu0 0.0
        %353 = vmatpush1.msra.mxu0 0.0
        %354 = vmatprep.subr.mxu0 0.0
        %355 = vmatpush1.msra.mxu0 0.0
        %356 = vmatprep.subr.mxu0 0.0
        %357 = vmatpush1.msra.mxu0 0.0
        %358 = vmatprep.subr.mxu0 0.0
        %359 = vmatpush1.msra.mxu0 0.0
        %360 = vmatprep.subr.mxu0 0.0
        %361 = vmatpush1.msra.mxu0 0.0
        %362 = vmatprep.subr.mxu0 0.0
        %363 = vmatpush1.msra.mxu0 0.0
        %364 = vmatprep.mubr.f32.mxu0 0.0
        %365 = vmatmul.mubr.f32.gmra.mrb[0].mxu0 %v281
        %v366 = vpop.f32.mrb[0].mxu0
        %v367 = vadd.f32 %v270, %v366
        %v368 = vpop.f32.mrb[0].mxu0
        %v369 = vadd.f32 %v270, %v368
        %370 = vmatprep.mubr.f32.mxu0 0.0
        %371 = vmatmul.mubr.f32.gmra.mrb[0].mxu0 %v283
        %v372 = vpop.f32.mrb[0].mxu0
        %v373 = vadd.f32 %v274, %v372
        %v374 = vpop.f32.mrb[0].mxu0
        %v375 = vadd.f32 %v274, %v374
        %376 = vmatprep.mubr.f32.mxu0 0.0
        %377 = vmatmul.mubr.f32.gmra.mrb[0].mxu0 %v285
        %v378 = vpop.f32.mrb[0].mxu0
        %v379 = vadd.f32 %v278, %v378
        %v380 = vpop.f32.mrb[0].mxu0
        %v381 = vadd.f32 %v278, %v380
        %382 = vdwg.mxu0
        %383 = vmatprep.subr.mxu0 %v259
        %384 = vmatpush1.msra.mxu0 %v258
        %385 = vmatprep.subr.mxu0 %v263
        %386 = vmatpush1.msra.mxu0 %v262
        %387 = vmatprep.subr.mxu0 %v298
        %388 = vmatpush1.msra.mxu0 %v295
        %389 = vmatprep.subr.mxu0 0.0
        %390 = vmatpush1.msra.mxu0 0.0
        %391 = vmatprep.subr.mxu0 0.0
        %392 = vmatpush1.msra.mxu0 0.0
        %393 = vmatprep.subr.mxu0 0.0
        %394 = vmatpush1.msra.mxu0 0.0
        %395 = vmatprep.subr.mxu0 0.0
        %396 = vmatpush1.msra.mxu0 0.0
        %397 = vmatprep.subr.mxu0 0.0
        %398 = vmatpush1.msra.mxu0 0.0
        %399 = vmatprep.subr.mxu0 0.0
        %400 = vmatpush1.msra.mxu0 0.0
        %401 = vmatprep.subr.mxu0 0.0
        %402 = vmatpush1.msra.mxu0 0.0
        %403 = vmatprep.subr.mxu0 0.0
        %404 = vmatpush1.msra.mxu0 0.0
        %405 = vmatprep.subr.mxu0 0.0
        %406 = vmatpush1.msra.mxu0 0.0
        %407 = vmatprep.subr.mxu0 0.0
        %408 = vmatpush1.msra.mxu0 0.0
        %409 = vmatprep.subr.mxu0 0.0
        %410 = vmatpush1.msra.mxu0 0.0
        %411 = vmatprep.subr.mxu0 0.0
        %412 = vmatpush1.msra.mxu0 0.0
        %413 = vmatprep.subr.mxu0 0.0
        %414 = vmatpush1.msra.mxu0 0.0
        %415 = vmatprep.subr.mxu0 0.0
        %416 = vmatpush1.msra.mxu0 0.0
        %417 = vmatprep.subr.mxu0 0.0
        %418 = vmatpush1.msra.mxu0 0.0
        %419 = vmatprep.subr.mxu0 0.0
        %420 = vmatpush1.msra.mxu0 0.0
        %421 = vmatprep.subr.mxu0 0.0
        %422 = vmatpush1.msra.mxu0 0.0
        %423 = vmatprep.subr.mxu0 0.0
        %424 = vmatpush1.msra.mxu0 0.0
        %425 = vmatprep.subr.mxu0 0.0
        %426 = vmatpush1.msra.mxu0 0.0
        %427 = vmatprep.subr.mxu0 0.0
        %428 = vmatpush1.msra.mxu0 0.0
        %429 = vmatprep.subr.mxu0 0.0
        %430 = vmatpush1.msra.mxu0 0.0
        %431 = vmatprep.subr.mxu0 0.0
        %432 = vmatpush1.msra.mxu0 0.0
        %433 = vmatprep.subr.mxu0 0.0
        %434 = vmatpush1.msra.mxu0 0.0
        %435 = vmatprep.subr.mxu0 0.0
        %436 = vmatpush1.msra.mxu0 0.0
        %437 = vmatprep.subr.mxu0 0.0
        %438 = vmatpush1.msra.mxu0 0.0
        %439 = vmatprep.subr.mxu0 0.0
        %440 = vmatpush1.msra.mxu0 0.0
        %441 = vmatprep.subr.mxu0 0.0
        %442 = vmatpush1.msra.mxu0 0.0
        %443 = vmatprep.subr.mxu0 0.0
        %444 = vmatpush1.msra.mxu0 0.0
        %445 = vmatprep.subr.mxu0 0.0
        %446 = vmatpush1.msra.mxu0 0.0
        %447 = vmatprep.mubr.f32.mxu0 0.0
        %448 = vmatmul.mubr.f32.gmra.mrb[0].mxu0 %v281
        %v449 = vpop.f32.mrb[0].mxu0
        %v450 = vadd.f32 %v270, %v449
        %v451 = vpop.f32.mrb[0].mxu0
        %v452 = vadd.f32 %v270, %v451
        %453 = vmatprep.mubr.f32.mxu0 0.0
        %454 = vmatmul.mubr.f32.gmra.mrb[0].mxu0 %v283
        %v455 = vpop.f32.mrb[0].mxu0
        %v456 = vadd.f32 %v274, %v455
        %v457 = vpop.f32.mrb[0].mxu0
        %v458 = vadd.f32 %v274, %v457
        %459 = vmatprep.mubr.f32.mxu0 0.0
        %460 = vmatmul.mubr.f32.gmra.mrb[0].mxu0 %v285
        %v461 = vpop.f32.mrb[0].mxu0
        %v462 = vadd.f32 %v278, %v461
        %v463 = vpop.f32.mrb[0].mxu0
        %v464 = vadd.f32 %v278, %v463
        %465 = vdwg.mxu0
        %v466 = vtanh.pop %v367
        %v467 = vtanh.pop %v369
        %v468 = vtanh.pop %v450
        %v469 = vtanh.pop %v452
        %v470 = vtanh.pop %v373
        %v471 = vtanh.pop %v375
        %v472 = vtanh.pop %v456
        %v473 = vtanh.pop %v458
        %v474 = vtanh.pop %v379
        %v475 = vtanh.pop %v381
        %v476 = vtanh.pop %v462
        %v477 = vtanh.pop %v464
        %478 = vset.pattern.permute.xlu0 23
        %479 = vperm.xlu0 %478, %v178
        %v480 = vpop.permute.xlu0 %479
        %482 = vset.pattern.permute.xlu0 23
        %483 = vperm.xlu0 %482, %v179
        %v484 = vpop.permute.xlu0 %483
        %486 = vset.pattern.permute.xlu0 23
        %487 = vperm.xlu0 %486, %v180
        %v488 = vpop.permute.xlu0 %487
        %v492 = vrot.slane %v180, 4
        %v493 = vrot.slane %v181, 4
        %v494 = vsel %vm287, %v492, %v493
        %v495 = vrot.slane %v182, 4
        %v496 = vsel %vm287, %v493, %v495
        %v497 = vsel %vm280, %v494, 0
        %v499 = vsel %vm280, %v496, 0
        %v501 = vsel %vm280, %v495, 0
        %v504 = vsel %vm287, %v474, 0
        %v507 = vsel %vm287, %v475, 0
        %v510 = vsel %vm287, %v476, 0
        %v513 = vsel %vm287, %v477, 0
        %515 = vmatprep.subr.mxu0 %v467
        %516 = vmatpush1.msra.mxu0 %v466
        %517 = vmatprep.subr.mxu0 %v471
        %518 = vmatpush1.msra.mxu0 %v470
        %519 = vmatprep.subr.mxu0 %v507
        %520 = vmatpush1.msra.mxu0 %v504
        %521 = vmatprep.subr.mxu0 0.0
        %522 = vmatpush1.msra.mxu0 0.0
        %523 = vmatprep.subr.mxu0 0.0
        %524 = vmatpush1.msra.mxu0 0.0
        %525 = vmatprep.subr.mxu0 0.0
        %526 = vmatpush1.msra.mxu0 0.0
        %527 = vmatprep.subr.mxu0 0.0
        %528 = vmatpush1.msra.mxu0 0.0
        %529 = vmatprep.subr.mxu0 0.0
        %530 = vmatpush1.msra.mxu0 0.0
        %531 = vmatprep.subr.mxu0 0.0
        %532 = vmatpush1.msra.mxu0 0.0
        %533 = vmatprep.subr.mxu0 0.0
        %534 = vmatpush1.msra.mxu0 0.0
        %535 = vmatprep.subr.mxu0 0.0
        %536 = vmatpush1.msra.mxu0 0.0
        %537 = vmatprep.subr.mxu0 0.0
        %538 = vmatpush1.msra.mxu0 0.0
        %539 = vmatprep.subr.mxu0 0.0
        %540 = vmatpush1.msra.mxu0 0.0
        %541 = vmatprep.subr.mxu0 0.0
        %542 = vmatpush1.msra.mxu0 0.0
        %543 = vmatprep.subr.mxu0 0.0
        %544 = vmatpush1.msra.mxu0 0.0
        %545 = vmatprep.subr.mxu0 0.0
        %546 = vmatpush1.msra.mxu0 0.0
        %547 = vmatprep.subr.mxu0 0.0
        %548 = vmatpush1.msra.mxu0 0.0
        %549 = vmatprep.subr.mxu0 0.0
        %550 = vmatpush1.msra.mxu0 0.0
        %551 = vmatprep.subr.mxu0 0.0
        %552 = vmatpush1.msra.mxu0 0.0
        %553 = vmatprep.subr.mxu0 0.0
        %554 = vmatpush1.msra.mxu0 0.0
        %555 = vmatprep.subr.mxu0 0.0
        %556 = vmatpush1.msra.mxu0 0.0
        %557 = vmatprep.subr.mxu0 0.0
        %558 = vmatpush1.msra.mxu0 0.0
        %559 = vmatprep.subr.mxu0 0.0
        %560 = vmatpush1.msra.mxu0 0.0
        %561 = vmatprep.subr.mxu0 0.0
        %562 = vmatpush1.msra.mxu0 0.0
        %563 = vmatprep.subr.mxu0 0.0
        %564 = vmatpush1.msra.mxu0 0.0
        %565 = vmatprep.subr.mxu0 0.0
        %566 = vmatpush1.msra.mxu0 0.0
        %567 = vmatprep.subr.mxu0 0.0
        %568 = vmatpush1.msra.mxu0 0.0
        %569 = vmatprep.subr.mxu0 0.0
        %570 = vmatpush1.msra.mxu0 0.0
        %571 = vmatprep.subr.mxu0 0.0
        %572 = vmatpush1.msra.mxu0 0.0
        %573 = vmatprep.subr.mxu0 0.0
        %574 = vmatpush1.msra.mxu0 0.0
        %575 = vmatprep.subr.mxu0 0.0
        %576 = vmatpush1.msra.mxu0 0.0
        %577 = vmatprep.subr.mxu0 0.0
        %578 = vmatpush1.msra.mxu0 0.0
        %579 = vmatprep.mubr.f32.mxu0 0.0
        %580 = vmatmul.mubr.f32.gmra.mrb[0].mxu0 %v497
        %v581 = vpop.f32.mrb[0].mxu0
        %v582 = vadd.f32 %v480, %v581
        %v583 = vpop.f32.mrb[0].mxu0
        %v584 = vadd.f32 %v480, %v583
        %585 = vmatprep.mubr.f32.mxu0 0.0
        %586 = vmatmul.mubr.f32.gmra.mrb[0].mxu0 %v499
        %v587 = vpop.f32.mrb[0].mxu0
        %v588 = vadd.f32 %v484, %v587
        %v589 = vpop.f32.mrb[0].mxu0
        %v590 = vadd.f32 %v484, %v589
        %591 = vmatprep.mubr.f32.mxu0 0.0
        %592 = vmatmul.mubr.f32.gmra.mrb[0].mxu0 %v501
        %v593 = vpop.f32.mrb[0].mxu0
        %v594 = vadd.f32 %v488, %v593
        %v595 = vpop.f32.mrb[0].mxu0
        %v596 = vadd.f32 %v488, %v595
        %597 = vdwg.mxu0
        %598 = vmatprep.subr.mxu0 %v469
        %599 = vmatpush1.msra.mxu0 %v468
        %600 = vmatprep.subr.mxu0 %v473
        %601 = vmatpush1.msra.mxu0 %v472
        %602 = vmatprep.subr.mxu0 %v513
        %603 = vmatpush1.msra.mxu0 %v510
        %604 = vmatprep.subr.mxu0 0.0
        %605 = vmatpush1.msra.mxu0 0.0
        %606 = vmatprep.subr.mxu0 0.0
        %607 = vmatpush1.msra.mxu0 0.0
        %608 = vmatprep.subr.mxu0 0.0
        %609 = vmatpush1.msra.mxu0 0.0
        %610 = vmatprep.subr.mxu0 0.0
        %611 = vmatpush1.msra.mxu0 0.0
        %612 = vmatprep.subr.mxu0 0.0
        %613 = vmatpush1.msra.mxu0 0.0
        %614 = vmatprep.subr.mxu0 0.0
        %615 = vmatpush1.msra.mxu0 0.0
        %616 = vmatprep.subr.mxu0 0.0
        %617 = vmatpush1.msra.mxu0 0.0
        %618 = vmatprep.subr.mxu0 0.0
        %619 = vmatpush1.msra.mxu0 0.0
        %620 = vmatprep.subr.mxu0 0.0
        %621 = vmatpush1.msra.mxu0 0.0
        %622 = vmatprep.subr.mxu0 0.0
        %623 = vmatpush1.msra.mxu0 0.0
        %624 = vmatprep.subr.mxu0 0.0
        %625 = vmatpush1.msra.mxu0 0.0
        %626 = vmatprep.subr.mxu0 0.0
        %627 = vmatpush1.msra.mxu0 0.0
        %628 = vmatprep.subr.mxu0 0.0
        %629 = vmatpush1.msra.mxu0 0.0
        %630 = vmatprep.subr.mxu0 0.0
        %631 = vmatpush1.msra.mxu0 0.0
        %632 = vmatprep.subr.mxu0 0.0
        %633 = vmatpush1.msra.mxu0 0.0
        %634 = vmatprep.subr.mxu0 0.0
        %635 = vmatpush1.msra.mxu0 0.0
        %636 = vmatprep.subr.mxu0 0.0
        %637 = vmatpush1.msra.mxu0 0.0
        %638 = vmatprep.subr.mxu0 0.0
        %639 = vmatpush1.msra.mxu0 0.0
        %640 = vmatprep.subr.mxu0 0.0
        %641 = vmatpush1.msra.mxu0 0.0
        %642 = vmatprep.subr.mxu0 0.0
        %643 = vmatpush1.msra.mxu0 0.0
        %644 = vmatprep.subr.mxu0 0.0
        %645 = vmatpush1.msra.mxu0 0.0
        %646 = vmatprep.subr.mxu0 0.0
        %647 = vmatpush1.msra.mxu0 0.0
        %648 = vmatprep.subr.mxu0 0.0
        %649 = vmatpush1.msra.mxu0 0.0
        %650 = vmatprep.subr.mxu0 0.0
        %651 = vmatpush1.msra.mxu0 0.0
        %652 = vmatprep.subr.mxu0 0.0
        %653 = vmatpush1.msra.mxu0 0.0
        %654 = vmatprep.subr.mxu0 0.0
        %655 = vmatpush1.msra.mxu0 0.0
        %656 = vmatprep.subr.mxu0 0.0
        %657 = vmatpush1.msra.mxu0 0.0
        %658 = vmatprep.subr.mxu0 0.0
        %659 = vmatpush1.msra.mxu0 0.0
        %660 = vmatprep.subr.mxu0 0.0
        %661 = vmatpush1.msra.mxu0 0.0
        %662 = vmatprep.mubr.f32.mxu0 0.0
        %663 = vmatmul.mubr.f32.gmra.mrb[0].mxu0 %v497
        %v664 = vpop.f32.mrb[0].mxu0
        %v665 = vadd.f32 %v480, %v664
        %v666 = vpop.f32.mrb[0].mxu0
        %v667 = vadd.f32 %v480, %v666
        %668 = vmatprep.mubr.f32.mxu0 0.0
        %669 = vmatmul.mubr.f32.gmra.mrb[0].mxu0 %v499
        %v670 = vpop.f32.mrb[0].mxu0
        %v671 = vadd.f32 %v484, %v670
        %v672 = vpop.f32.mrb[0].mxu0
        %v673 = vadd.f32 %v484, %v672
        %674 = vmatprep.mubr.f32.mxu0 0.0
        %675 = vmatmul.mubr.f32.gmra.mrb[0].mxu0 %v501
        %v676 = vpop.f32.mrb[0].mxu0
        %v677 = vadd.f32 %v488, %v676
        %v678 = vpop.f32.mrb[0].mxu0
        %v679 = vadd.f32 %v488, %v678
        %680 = vdwg.mxu0
        %v681 = vtanh.pop %v582
        %v682 = vtanh.pop %v584
        %v683 = vtanh.pop %v665
        %v684 = vtanh.pop %v667
        %v685 = vtanh.pop %v588
        %v686 = vtanh.pop %v590
        %v687 = vtanh.pop %v671
        %v688 = vtanh.pop %v673
        %v689 = vtanh.pop %v594
        %v690 = vtanh.pop %v596
        %v691 = vtanh.pop %v677
        %v692 = vtanh.pop %v679
        %694 = vset.pattern.permute.xlu0 20
        %695 = vperm.xlu0 %694, %v183
        %v696 = vpop.permute.xlu0 %695
        %v698 = vsel %vm280, %v183, 0
        %v701 = vsel %vm287, %v689, 0
        %v704 = vsel %vm287, %v690, 0
        %v707 = vsel %vm287, %v691, 0
        %v710 = vsel %vm287, %v692, 0
        %712 = vmatprep.subr.mxu0 %v682
        %713 = vmatpush1.msra.mxu0 %v681
        %714 = vmatprep.subr.mxu0 %v686
        %715 = vmatpush1.msra.mxu0 %v685
        %716 = vmatprep.subr.mxu0 %v704
        %717 = vmatpush1.msra.mxu0 %v701
        %718 = vmatprep.subr.mxu0 0.0
        %719 = vmatpush1.msra.mxu0 0.0
        %720 = vmatprep.subr.mxu0 0.0
        %721 = vmatpush1.msra.mxu0 0.0
        %722 = vmatprep.subr.mxu0 0.0
        %723 = vmatpush1.msra.mxu0 0.0
        %724 = vmatprep.subr.mxu0 0.0
        %725 = vmatpush1.msra.mxu0 0.0
        %726 = vmatprep.subr.mxu0 0.0
        %727 = vmatpush1.msra.mxu0 0.0
        %728 = vmatprep.subr.mxu0 0.0
        %729 = vmatpush1.msra.mxu0 0.0
        %730 = vmatprep.subr.mxu0 0.0
        %731 = vmatpush1.msra.mxu0 0.0
        %732 = vmatprep.subr.mxu0 0.0
        %733 = vmatpush1.msra.mxu0 0.0
        %734 = vmatprep.subr.mxu0 0.0
        %735 = vmatpush1.msra.mxu0 0.0
        %736 = vmatprep.subr.mxu0 0.0
        %737 = vmatpush1.msra.mxu0 0.0
        %738 = vmatprep.subr.mxu0 0.0
        %739 = vmatpush1.msra.mxu0 0.0
        %740 = vmatprep.subr.mxu0 0.0
        %741 = vmatpush1.msra.mxu0 0.0
        %742 = vmatprep.subr.mxu0 0.0
        %743 = vmatpush1.msra.mxu0 0.0
        %744 = vmatprep.subr.mxu0 0.0
        %745 = vmatpush1.msra.mxu0 0.0
        %746 = vmatprep.subr.mxu0 0.0
        %747 = vmatpush1.msra.mxu0 0.0
        %748 = vmatprep.subr.mxu0 0.0
        %749 = vmatpush1.msra.mxu0 0.0
        %750 = vmatprep.subr.mxu0 0.0
        %751 = vmatpush1.msra.mxu0 0.0
        %752 = vmatprep.subr.mxu0 0.0
        %753 = vmatpush1.msra.mxu0 0.0
        %754 = vmatprep.subr.mxu0 0.0
        %755 = vmatpush1.msra.mxu0 0.0
        %756 = vmatprep.subr.mxu0 0.0
        %757 = vmatpush1.msra.mxu0 0.0
        %758 = vmatprep.subr.mxu0 0.0
        %759 = vmatpush1.msra.mxu0 0.0
        %760 = vmatprep.subr.mxu0 0.0
        %761 = vmatpush1.msra.mxu0 0.0
        %762 = vmatprep.subr.mxu0 0.0
        %763 = vmatpush1.msra.mxu0 0.0
        %764 = vmatprep.subr.mxu0 0.0
        %765 = vmatpush1.msra.mxu0 0.0
        %766 = vmatprep.subr.mxu0 0.0
        %767 = vmatpush1.msra.mxu0 0.0
        %768 = vmatprep.subr.mxu0 0.0
        %769 = vmatpush1.msra.mxu0 0.0
        %770 = vmatprep.subr.mxu0 0.0
        %771 = vmatpush1.msra.mxu0 0.0
        %772 = vmatprep.subr.mxu0 0.0
        %773 = vmatpush1.msra.mxu0 0.0
        %774 = vmatprep.subr.mxu0 0.0
        %775 = vmatpush1.msra.mxu0 0.0
        %776 = vmatprep.mubr.f32.mxu0 0.0
        %777 = vmatmul.mubr.f32.gmra.mrb[0].mxu0 %v698
        %v778 = vpop.f32.mrb[0].mxu0
        %v779 = vadd.f32 %v696, %v778
        %v780 = vpop.f32.mrb[0].mxu0
        %v781 = vadd.f32 %v696, %v780
        %782 = vdwg.mxu0
        %783 = vmatprep.subr.mxu0 %v684
        %784 = vmatpush1.msra.mxu0 %v683
        %785 = vmatprep.subr.mxu0 %v688
        %786 = vmatpush1.msra.mxu0 %v687
        %787 = vmatprep.subr.mxu0 %v710
        %788 = vmatpush1.msra.mxu0 %v707
        %789 = vmatprep.subr.mxu0 0.0
        %790 = vmatpush1.msra.mxu0 0.0
        %791 = vmatprep.subr.mxu0 0.0
        %792 = vmatpush1.msra.mxu0 0.0
        %793 = vmatprep.subr.mxu0 0.0
        %794 = vmatpush1.msra.mxu0 0.0
        %795 = vmatprep.subr.mxu0 0.0
        %796 = vmatpush1.msra.mxu0 0.0
        %797 = vmatprep.subr.mxu0 0.0
        %798 = vmatpush1.msra.mxu0 0.0
        %799 = vmatprep.subr.mxu0 0.0
        %800 = vmatpush1.msra.mxu0 0.0
        %801 = vmatprep.subr.mxu0 0.0
        %802 = vmatpush1.msra.mxu0 0.0
        %803 = vmatprep.subr.mxu0 0.0
        %804 = vmatpush1.msra.mxu0 0.0
        %805 = vmatprep.subr.mxu0 0.0
        %806 = vmatpush1.msra.mxu0 0.0
        %807 = vmatprep.subr.mxu0 0.0
        %808 = vmatpush1.msra.mxu0 0.0
        %809 = vmatprep.subr.mxu0 0.0
        %810 = vmatpush1.msra.mxu0 0.0
        %811 = vmatprep.subr.mxu0 0.0
        %812 = vmatpush1.msra.mxu0 0.0
        %813 = vmatprep.subr.mxu0 0.0
        %814 = vmatpush1.msra.mxu0 0.0
        %815 = vmatprep.subr.mxu0 0.0
        %816 = vmatpush1.msra.mxu0 0.0
        %817 = vmatprep.subr.mxu0 0.0
        %818 = vmatpush1.msra.mxu0 0.0
        %819 = vmatprep.subr.mxu0 0.0
        %820 = vmatpush1.msra.mxu0 0.0
        %821 = vmatprep.subr.mxu0 0.0
        %822 = vmatpush1.msra.mxu0 0.0
        %823 = vmatprep.subr.mxu0 0.0
        %824 = vmatpush1.msra.mxu0 0.0
        %825 = vmatprep.subr.mxu0 0.0
        %826 = vmatpush1.msra.mxu0 0.0
        %827 = vmatprep.subr.mxu0 0.0
        %828 = vmatpush1.msra.mxu0 0.0
        %829 = vmatprep.subr.mxu0 0.0
        %830 = vmatpush1.msra.mxu0 0.0
        %831 = vmatprep.subr.mxu0 0.0
        %832 = vmatpush1.msra.mxu0 0.0
        %833 = vmatprep.subr.mxu0 0.0
        %834 = vmatpush1.msra.mxu0 0.0
        %835 = vmatprep.subr.mxu0 0.0
        %836 = vmatpush1.msra.mxu0 0.0
        %837 = vmatprep.subr.mxu0 0.0
        %838 = vmatpush1.msra.mxu0 0.0
        %839 = vmatprep.subr.mxu0 0.0
        %840 = vmatpush1.msra.mxu0 0.0
        %841 = vmatprep.subr.mxu0 0.0
        %842 = vmatpush1.msra.mxu0 0.0
        %843 = vmatprep.subr.mxu0 0.0
        %844 = vmatpush1.msra.mxu0 0.0
        %845 = vmatprep.subr.mxu0 0.0
        %846 = vmatpush1.msra.mxu0 0.0
        %847 = vmatprep.mubr.f32.mxu0 0.0
        %848 = vmatmul.mubr.f32.gmra.mrb[0].mxu0 %v698
        %v849 = vpop.f32.mrb[0].mxu0
        %v850 = vadd.f32 %v696, %v849
        %v851 = vpop.f32.mrb[0].mxu0
        %v852 = vadd.f32 %v696, %v851
        %853 = vdwg.mxu0
        %v858 = vcombine.low %v779, %v781
        %v859 = vcombine.low %v850, %v852
        %862 = vst [vmem:[%s174] sm:$0xff] %v858
        %863 = vst [vmem:[%s174 + $0x8] sm:$0xff] %v859
        %s864 = sand.u32 %s75, 1
        %s865 = scalar_lea.sflag [#allocation4], %s864
        %s866 = sand.u32 %s75, 1
        %s867 = smul.addr %s866, 16
        %s868 = scalar_lea.vmem [#allocation7], %s867
        // Predicated region
        $region37: #{tpu_custom_call.1} parent=27 // pred_check
          %p869 = pneg %p85
        $region38: #{tpu_custom_call.1} parent=27 // pred_check_branch
          %871 = sbr.rel (%p869) target = $region40
        $region39: #{tpu_custom_call.1} parent=27 // pred_region
          %s872 = smul.u32 4, %s20
          %s874 = ssub.s32 256, 256
          %875 = vsyncadd %s865, %s874
          %s876 = smul.addr %s872, 64
          %s877 = scalar_lea.hbm %s2, %s876
          %s879 = sshll.u32 %s868, 4
          %s880 = int_to_ptr.vmem [resolvable:$true] %s879
          %882 = dma.vmem_to_hbm [thread:$0]  %s880, 256, %s877, %s865
        $region40: #{tpu_custom_call.1} parent=27 // pred_fallthru
          _
      $region28: #{tpu_custom_call.1} parent=5 // pred_fallthru
        _
      %p883 = scmp.le.s32.totalorder 2, %s15
      // Predicated region
      $region41: #{tpu_custom_call.1} parent=5 // pred_check
        %p884 = pneg %p883
      $region42: #{tpu_custom_call.1} parent=5 // pred_check_branch
        %886 = sbr.rel (%p884) target = $region44
      $region43: #{tpu_custom_call.1} parent=5 // pred_region
        %s887 = ssub.s32 %s15, 2
        // Predicated region
        $region45: #{tpu_custom_call.1} parent=43 // pred_check
          %p888 = pneg %p91
        $region46: #{tpu_custom_call.1} parent=43 // pred_check_branch
          %890 = sbr.rel (%p888) target = $region48
        $region47: #{tpu_custom_call.1} parent=43 // pred_region
          %s891 = sand.u32 %s76, 1
          %s892 = scalar_lea.sflag [#allocation4], %s891
          %s893 = sand.u32 %s76, 1
          %s894 = smul.addr %s893, 16
          %s895 = scalar_lea.vmem [#allocation7], %s894
          %896 = dma.done %s892, 256
        $region48: #{tpu_custom_call.1} parent=43 // pred_fallthru
          _
      $region44: #{tpu_custom_call.1} parent=5 // pred_fallthru
        _
    $region6: #{tpu_custom_call.1} parent=1 // loop_footer
      %s19 = sadd.s32 1, %s15
    $region7: #{tpu_custom_call.1} parent=1 // loop_footer_branch
      %14 = sbr.rel target = $region3
    $region8: #{tpu_custom_call.1} parent=1 // loop_exit
      _
    %897 = vsyncpa [#allocation3], 1
    %s898 = scalar_lea.sflag [#allocation3], 1
    %899 = vsyncpa %s898, 1
    %900 = vsyncpa [#allocation6], 1
    %901 = vsyncpa [#allocation4], 1
    %s902 = scalar_lea.sflag [#allocation4], 1
    %903 = vsyncpa %s902, 1

</llo_original>
